<compile_context>
chip_gen: v5e
topology: v5e:2x2
jax: 0.10.0
libtpu: 0.0.40
codegen_flags: <defaults>
</compile_context>

<pallas_src>
import functools

import jax
import jax.numpy as jnp
from jax.experimental import pallas as pl
from jax.experimental.pallas import tpu as pltpu


def discriminator_kernel(x_ref, w1_ref, b1_ref, w2_ref, b2_ref, w3_ref, b3_ref, o_ref):
    # In-kernel f32 -> bf16 cast of the input tile (VPU op, hidden under the MXU).
    x = x_ref[...].astype(jnp.bfloat16)
    # Layer 1: Linear (bf16 MXU inputs, f32 accumulate) + Dropout (identity) + ReLU
    h = jnp.dot(x, w1_ref[...], preferred_element_type=jnp.float32)
    h = jnp.maximum(h + b1_ref[...], 0.0)               # b1 is (1, n_hidden) -> broadcasts
    # Layer 2: Linear + Dropout (identity) + ReLU
    h = jnp.dot(h.astype(jnp.bfloat16), w2_ref[...], preferred_element_type=jnp.float32)
    h = jnp.maximum(h + b2_ref[...], 0.0)
    # Layer 3: Linear (output lane-padded to 128; wrapper slices real column) + Sigmoid
    logits = jnp.dot(h.astype(jnp.bfloat16), w3_ref[...], preferred_element_type=jnp.float32)
    logits = logits + b3_ref[...]
    o_ref[...] = jax.nn.sigmoid(logits).astype(o_ref.dtype)
    # TODO(synk): training-mode Dropout (stochastic masking) not implemented; inference semantics only.


def prepare_params(w1, b1, w2, b2, w3, b3):
    """One-time parameter prep: bf16 weights, f32 biases, lane-pad the last layer to 128."""
    out_dim = w3.shape[1]
    out_pad = pl.cdiv(out_dim, 128) * 128
    w3p = jnp.pad(w3, ((0, 0), (0, out_pad - out_dim)))
    b3p = jnp.pad(b3, ((0, 0), (0, out_pad - out_dim)))
    params = (
        w1.astype(jnp.bfloat16), b1.astype(jnp.float32),
        w2.astype(jnp.bfloat16), b2.astype(jnp.float32),
        w3p.astype(jnp.bfloat16), b3p.astype(jnp.float32),
    )
    return params, out_dim


def choose_batch_tile(B, max_tile=512, min_tile=16):
    """Keep >= 4 grid steps when B allows (>= 2 per v7x TensorCore); tile multiple of 16."""
    tile = (B // 4 // min_tile) * min_tile
    return min(max_tile, max(min_tile, tile))


@functools.partial(jax.jit, static_argnames=("batch_tile", "out_dim"))
def _discriminator_forward(x, w1, b1, w2, b2, w3p, b3p, *, batch_tile, out_dim):
    B, n_in = x.shape
    n_hidden = w1.shape[1]
    out_pad = w3p.shape[1]

    grid = (pl.cdiv(B, batch_tile),)  # ragged last block handled by Pallas, no jnp.pad of x

    # Constant-index weights/biases: single-buffered (fetched once, no double-buffer waste).
    def const(shape):
        return pl.BlockSpec(shape, lambda i: (0, 0), pipeline_mode=pl.Buffered(1))

    out = pl.pallas_call(
        discriminator_kernel,
        out_shape=jax.ShapeDtypeStruct((B, out_pad), jnp.bfloat16),
        grid_spec=pltpu.PrefetchScalarGridSpec(
            num_scalar_prefetch=0,
            grid=grid,
            in_specs=[
                pl.BlockSpec((batch_tile, n_in), lambda i: (i, 0)),  # x tile (f32 in HBM)
                const((n_in, n_hidden)),                             # w1 (bf16)
                const((1, n_hidden)),                                # b1 (f32)
                const((n_hidden, n_hidden)),                         # w2 (bf16)
                const((1, n_hidden)),                                # b2 (f32)
                const((n_hidden, out_pad)),                          # w3 (bf16, lane-padded)
                const((1, out_pad)),                                 # b3 (f32, lane-padded)
            ],
            out_specs=pl.BlockSpec((batch_tile, out_pad), lambda i: (i, 0)),
        ),
        compiler_params=pltpu.CompilerParams(
            dimension_semantics=("parallel",),
        ),
    )(x, w1, b1, w2, b2, w3p, b3p)

    return out[:, :out_dim]


def discriminator_forward(x, params, out_dim, batch_tile=None):
    """x: (B, n_code) float32. params from prepare_params(). Returns sigmoid outputs (B, out_dim) bf16."""
    if batch_tile is None:
        batch_tile = choose_batch_tile(x.shape[0])
    return _discriminator_forward(x, *params, batch_tile=batch_tile, out_dim=out_dim)


def init_linear(key, fan_in, fan_out, dtype=jnp.float32):
    """Deterministic init mimicking torch.nn.Linear default: U(-1/sqrt(fan_in), 1/sqrt(fan_in))."""
    kw, kb = jax.random.split(key)
    bound = 1.0 / (fan_in ** 0.5)
    # stored as (in, out) so forward is x @ W
    w = jax.random.uniform(kw, (fan_in, fan_out), dtype, minval=-bound, maxval=bound)
    b = jax.random.uniform(kb, (1, fan_out), dtype, minval=-bound, maxval=bound)
    return w, b


def discriminator_reference_bf16(x, w1, b1, w2, b2, w3, b3):
    """Mirrors the kernel's matmul numerics: bf16 MXU inputs, f32 accumulation, f32 epilogue."""
    bf16 = jnp.bfloat16
    h = jnp.dot(x.astype(bf16), w1.astype(bf16), preferred_element_type=jnp.float32) + b1
    h = jnp.maximum(h, 0.0)
    h = jnp.dot(h.astype(bf16), w2.astype(bf16), preferred_element_type=jnp.float32) + b2
    h = jnp.maximum(h, 0.0)
    logits = jnp.dot(h.astype(bf16), w3.astype(bf16), preferred_element_type=jnp.float32) + b3
    return jax.nn.sigmoid(logits)


def discriminator_reference_f32(x, w1, b1, w2, b2, w3, b3):
    h = jnp.maximum(x @ w1 + b1, 0.0)
    h = jnp.maximum(h @ w2 + b2, 0.0)
    return jax.nn.sigmoid(h @ w3 + b3)


if __name__ == "__main__":
    # Small shapes consistent with the module (ragged batch to exercise the cdiv grid path).
    B, n_code, n_hidden = 100, 128, 64

    key = jax.random.PRNGKey(0)
    kx, k1, k2, k3 = jax.random.split(key, 4)

    x = jax.random.normal(kx, (B, n_code), jnp.float32)
    w1, b1 = init_linear(k1, n_code, n_hidden)
    w2, b2 = init_linear(k2, n_hidden, n_hidden)
    w3, b3 = init_linear(k3, n_hidden, 1)

    params, out_dim = prepare_params(w1, b1, w2, b2, w3, b3)

    out = discriminator_forward(x, params, out_dim)
    out = jax.block_until_ready(out)
    assert out.shape == (B, 1), out.shape

    out_f32 = out.astype(jnp.float32)
    ref_bf16 = discriminator_reference_bf16(x, w1, b1, w2, b2, w3, b3)
    assert jnp.allclose(out_f32, ref_bf16, atol=1e-2, rtol=1e-2), \
        "Pallas output mismatch vs bf16-matched reference"

    ref_f32 = discriminator_reference_f32(x, w1, b1, w2, b2, w3, b3)
    assert jnp.allclose(out_f32, ref_f32, atol=3e-2, rtol=3e-2), \
        "Pallas output mismatch vs f32 reference"

    print("KERNEL_OK")
</pallas_src>

<mosaic_0001>
module attributes {stable_mosaic.version = 11 : i64} {
  func.func @discriminator_kernel(%arg0: i32, %arg1: memref<16x128xf32, #tpu.memory_space<vmem>>, %arg2: memref<128x64xbf16, #tpu.memory_space<vmem>>, %arg3: memref<1x64xf32, #tpu.memory_space<vmem>>, %arg4: memref<64x64xbf16, #tpu.memory_space<vmem>>, %arg5: memref<1x64xf32, #tpu.memory_space<vmem>>, %arg6: memref<64x128xbf16, #tpu.memory_space<vmem>>, %arg7: memref<1x128xf32, #tpu.memory_space<vmem>>, %arg8: memref<16x128xbf16, #tpu.memory_space<vmem>>) attributes {dimension_semantics = [#tpu.dimension_semantics<parallel>], iteration_bounds = array<i64: 7>, scalar_prefetch = 0 : i64, scratch_operands = 0 : i64, tpu.core_type = #tpu.core_type<tc>, window_params = [{transform_indices = @transform_0, window_bounds = array<i64: 16, 128>}, {pipeline_mode = #tpu.pipeline_mode<synchronous>, transform_indices = @transform_1, window_bounds = array<i64: 128, 64>}, {pipeline_mode = #tpu.pipeline_mode<synchronous>, transform_indices = @transform_2, window_bounds = array<i64: 1, 64>}, {pipeline_mode = #tpu.pipeline_mode<synchronous>, transform_indices = @transform_3, window_bounds = array<i64: 64, 64>}, {pipeline_mode = #tpu.pipeline_mode<synchronous>, transform_indices = @transform_4, window_bounds = array<i64: 1, 64>}, {pipeline_mode = #tpu.pipeline_mode<synchronous>, transform_indices = @transform_5, window_bounds = array<i64: 64, 128>}, {pipeline_mode = #tpu.pipeline_mode<synchronous>, transform_indices = @transform_6, window_bounds = array<i64: 1, 128>}, {transform_indices = @transform_7, window_bounds = array<i64: 16, 128>}]} {
    %c0 = arith.constant 0 : index
    %c0_0 = arith.constant 0 : index
    %0 = vector.load %arg1[%c0, %c0_0] : memref<16x128xf32, #tpu.memory_space<vmem>>, vector<16x128xf32>
    %1 = arith.truncf %0 : vector<16x128xf32> to vector<16x128xbf16>
    %c0_1 = arith.constant 0 : index
    %c0_2 = arith.constant 0 : index
    %2 = vector.load %arg2[%c0_1, %c0_2] : memref<128x64xbf16, #tpu.memory_space<vmem>>, vector<128x64xbf16>
    %cst = arith.constant dense<0.000000e+00> : vector<16x64xf32>
    %3 = tpu.matmul %1, %2, %cst {dimension_numbers = #tpu.dot_dimension_numbers<[1], [0], [0], [1], [0, 0, 1, 1], [], []>} : vector<16x128xbf16>, vector<128x64xbf16>, vector<16x64xf32> -> vector<16x64xf32>
    %c0_3 = arith.constant 0 : index
    %c0_4 = arith.constant 0 : index
    %4 = vector.load %arg3[%c0_3, %c0_4] : memref<1x64xf32, #tpu.memory_space<vmem>>, vector<1x64xf32>
    %5 = vector.broadcast %4 : vector<1x64xf32> to vector<16x64xf32>
    %6 = arith.addf %3, %5 : vector<16x64xf32>
    %cst_5 = arith.constant 0.000000e+00 : f32
    %7 = vector.broadcast %cst_5 : f32 to vector<16x64xf32>
    %8 = arith.maximumf %6, %7 : vector<16x64xf32>
    %9 = arith.truncf %8 : vector<16x64xf32> to vector<16x64xbf16>
    %c0_6 = arith.constant 0 : index
    %c0_7 = arith.constant 0 : index
    %10 = vector.load %arg4[%c0_6, %c0_7] : memref<64x64xbf16, #tpu.memory_space<vmem>>, vector<64x64xbf16>
    %cst_8 = arith.constant dense<0.000000e+00> : vector<16x64xf32>
    %11 = tpu.matmul %9, %10, %cst_8 {dimension_numbers = #tpu.dot_dimension_numbers<[1], [0], [0], [1], [0, 0, 1, 1], [], []>} : vector<16x64xbf16>, vector<64x64xbf16>, vector<16x64xf32> -> vector<16x64xf32>
    %c0_9 = arith.constant 0 : index
    %c0_10 = arith.constant 0 : index
    %12 = vector.load %arg5[%c0_9, %c0_10] : memref<1x64xf32, #tpu.memory_space<vmem>>, vector<1x64xf32>
    %13 = vector.broadcast %12 : vector<1x64xf32> to vector<16x64xf32>
    %14 = arith.addf %11, %13 : vector<16x64xf32>
    %cst_11 = arith.constant 0.000000e+00 : f32
    %15 = vector.broadcast %cst_11 : f32 to vector<16x64xf32>
    %16 = arith.maximumf %14, %15 : vector<16x64xf32>
    %17 = arith.truncf %16 : vector<16x64xf32> to vector<16x64xbf16>
    %c0_12 = arith.constant 0 : index
    %c0_13 = arith.constant 0 : index
    %18 = vector.load %arg6[%c0_12, %c0_13] : memref<64x128xbf16, #tpu.memory_space<vmem>>, vector<64x128xbf16>
    %cst_14 = arith.constant dense<0.000000e+00> : vector<16x128xf32>
    %19 = tpu.matmul %17, %18, %cst_14 {dimension_numbers = #tpu.dot_dimension_numbers<[1], [0], [0], [1], [0, 0, 1, 1], [], []>} : vector<16x64xbf16>, vector<64x128xbf16>, vector<16x128xf32> -> vector<16x128xf32>
    %c0_15 = arith.constant 0 : index
    %c0_16 = arith.constant 0 : index
    %20 = vector.load %arg7[%c0_15, %c0_16] : memref<1x128xf32, #tpu.memory_space<vmem>>, vector<1x128xf32>
    %21 = vector.broadcast %20 : vector<1x128xf32> to vector<16x128xf32>
    %22 = arith.addf %19, %21 : vector<16x128xf32>
    %23 = arith.negf %22 : vector<16x128xf32>
    %24 = math.exp %23 : vector<16x128xf32>
    %cst_17 = arith.constant 1.000000e+00 : f32
    %25 = vector.broadcast %cst_17 : f32 to vector<16x128xf32>
    %26 = arith.addf %25, %24 : vector<16x128xf32>
    %27 = arith.divf %25, %26 : vector<16x128xf32>
    %28 = arith.truncf %27 : vector<16x128xf32> to vector<16x128xbf16>
    %c0_18 = arith.constant 0 : index
    %c0_19 = arith.constant 0 : index
    %29 = vector.load %arg8[%c0_18, %c0_19] : memref<16x128xbf16, #tpu.memory_space<vmem>>, vector<16x128xbf16>
    tpu.vector_store %arg8[%c0_18, %c0_19], %28 {strides = array<i32>} : memref<16x128xbf16, #tpu.memory_space<vmem>>, vector<16x128xbf16>,
    return
  }
  func.func @transform_0(%arg0: i32) -> (i32, i32) {
    %c0_i32 = arith.constant 0 : i32
    %c0_i32_0 = arith.constant 0 : i32
    return %arg0, %c0_i32 : i32, i32
  }
  func.func @transform_1(%arg0: i32) -> (i32, i32) {
    %c0_i32 = arith.constant 0 : i32
    %c0_i32_0 = arith.constant 0 : i32
    %c0_i32_1 = arith.constant 0 : i32
    return %c0_i32, %c0_i32_0 : i32, i32
  }
  func.func @transform_2(%arg0: i32) -> (i32, i32) {
    %c0_i32 = arith.constant 0 : i32
    %c0_i32_0 = arith.constant 0 : i32
    %c0_i32_1 = arith.constant 0 : i32
    return %c0_i32, %c0_i32_0 : i32, i32
  }
  func.func @transform_3(%arg0: i32) -> (i32, i32) {
    %c0_i32 = arith.constant 0 : i32
    %c0_i32_0 = arith.constant 0 : i32
    %c0_i32_1 = arith.constant 0 : i32
    return %c0_i32, %c0_i32_0 : i32, i32
  }
  func.func @transform_4(%arg0: i32) -> (i32, i32) {
    %c0_i32 = arith.constant 0 : i32
    %c0_i32_0 = arith.constant 0 : i32
    %c0_i32_1 = arith.constant 0 : i32
    return %c0_i32, %c0_i32_0 : i32, i32
  }
  func.func @transform_5(%arg0: i32) -> (i32, i32) {
    %c0_i32 = arith.constant 0 : i32
    %c0_i32_0 = arith.constant 0 : i32
    %c0_i32_1 = arith.constant 0 : i32
    return %c0_i32, %c0_i32_0 : i32, i32
  }
  func.func @transform_6(%arg0: i32) -> (i32, i32) {
    %c0_i32 = arith.constant 0 : i32
    %c0_i32_0 = arith.constant 0 : i32
    %c0_i32_1 = arith.constant 0 : i32
    return %c0_i32, %c0_i32_0 : i32, i32
  }
  func.func @transform_7(%arg0: i32) -> (i32, i32) {
    %c0_i32 = arith.constant 0 : i32
    %c0_i32_0 = arith.constant 0 : i32
    return %arg0, %c0_i32 : i32, i32
  }
}

</mosaic_0001>

<llo_original>
// kernel: _discriminator_forward.1
$region0: #{_discriminator_forward.1}
  #allocation0 [shape = 'u32[]', space=smem, size = 0x4, offset = 0x4, fixed_abs, tag = 'smem constant byte address 0x4 - core index']
  #allocation1 [shape = 'u32[72,128]{1,0:T(1,128)}', space=vmem, size = 0x9000, scoped, tag = 'internal scratch']
  %s0 = inlined_call_operand.hbm [shape: f32[100,128], index: 0, kind: input, shape index: {}]
  %s1 = inlined_call_operand.vmem [shape: bf16[128,64], index: 1, kind: input, shape index: {}]
  %s2 = inlined_call_operand.vmem [shape: f32[1,64], index: 2, kind: input, shape index: {}]
  %s3 = inlined_call_operand.vmem [shape: bf16[64,64], index: 3, kind: input, shape index: {}]
  %s4 = inlined_call_operand.vmem [shape: f32[1,64], index: 4, kind: input, shape index: {}]
  %s5 = inlined_call_operand.vmem [shape: bf16[64,128], index: 5, kind: input, shape index: {}]
  %s6 = inlined_call_operand.vmem [shape: f32[1,128], index: 6, kind: input, shape index: {}]
  %s7 = inlined_call_operand.vmem [shape: bf16[100,128], index: 7, kind: output, shape index: {}]
  %s8 = sld [smem:[#allocation0]]
  $region109: #{_discriminator_forward.1} parent=0
    _
  %s10 = ssub.s32 1, %s8
  %s11 = scalar_select 0, %s10, %s8
  $region1: #{_discriminator_forward.1} parent=0
    #allocation2 [shape = 'u8[16384]{0}', space=vmem, size = 0x4000, scoped, tag = 'input window, operand 0']
    #allocation3 [shape = 's32[2]{0}', space=sflag, size = 0x8, scoped, tag = 'scoped memory for _discriminator_forward.1']
    #allocation4 [shape = 'u8[8192]{0}', space=vmem, size = 0x2000, scoped, tag = 'output window, operand 0']
    %12 = vsyncpa [#allocation3], 0
    %s13 = scalar_lea.sflag [#allocation3], 1
    %14 = vsyncpa %s13, 0
    loop: start=0, step=1, limit=9
    $region2: #{_discriminator_forward.1} parent=1 // loop_pre_header
      _
    $region3: #{_discriminator_forward.1} parent=1 // loop_header
      %s16 = sphi 0, %s20
      %p17 = scmp.ge.s32.totalorder %s16, 9
      %s26 = sphi 0, %s28
      %s29 = sphi 0, %s26
      %s30 = sphi 0, %s29
      %s46 = sphi 0, %s30
      %s50 = sphi 0, %s50
      %s52 = sphi 0, %s50
      %s53 = sphi 0, %s52
      %s67 = sphi 0, %s53
      %s71 = sphi 0, %s71
      %s73 = sphi 0, %s71
      %s74 = sphi 0, %s73
      %s88 = sphi 0, %s74
      %s92 = sphi 0, %s92
      %s94 = sphi 0, %s92
      %s95 = sphi 0, %s94
      %s109 = sphi 0, %s95
      %s113 = sphi 0, %s113
      %s115 = sphi 0, %s113
      %s116 = sphi 0, %s115
      %s130 = sphi 0, %s116
      %s134 = sphi 0, %s134
      %s136 = sphi 0, %s134
      %s137 = sphi 0, %s136
      %s151 = sphi 0, %s137
      %s155 = sphi 0, %s155
      %s157 = sphi 0, %s155
      %s158 = sphi 0, %s157
      %s172 = sphi 0, %s158
      %s178 = sphi 0, %s180
      %s181 = sphi 0, %s178
      %s182 = sphi 0, %s181
      %s198 = sphi 0, %s182
    $region4: #{_discriminator_forward.1} parent=1 // loop_header_branch
      %19 = sbr.rel (%p17) target = $region8
    $region5: #{_discriminator_forward.1} parent=1 // loop_body
      %s21 = ssub.s32 %s16, 1
      %s22 = ssub.s32 %s16, 2
      %s23 = sadd.s32 %s16, 1
      %s24 = ssub.s32 %s16, %s23
      %p25 = scmp.eq.s32.totalorder %s24, 0
      %s27 = sadd.s32 %s26, 1
      %s28 = scalar_select %p25, %s26, %s27
      %p31 = pneg %p25
      %p32 = scmp.eq.s32.totalorder %s16, 6
      %p33 = por %p31, %p32
      %p34 = scmp.ne.s32.totalorder %s26, %s29
      %p35 = scmp.eq.s32.totalorder %s16, 0
      %p36 = por %p34, %p35
      %p37 = scmp.ne.s32.totalorder %s26, %s29
      %p38 = scmp.eq.s32.totalorder %s21, 6
      %p39 = por %p37, %p38
      %p40 = scmp.ne.s32.totalorder %s29, %s30
      %p41 = scmp.eq.s32.totalorder %s21, 0
      %p42 = por %p40, %p41
      %p43 = scmp.ne.s32.totalorder %s29, %s30
      %p44 = scmp.eq.s32.totalorder %s22, 6
      %p45 = por %p43, %p44
      %p47 = scmp.ne.s32.totalorder %s30, %s46
      %p48 = scmp.eq.s32.totalorder %s22, 0
      %p49 = por %p47, %p48
      %s51 = sadd.s32 %s50, 1
      %p54 = scmp.eq.s32.totalorder %s16, 6
      %p55 = scmp.ne.s32.totalorder %s50, %s52
      %p56 = scmp.eq.s32.totalorder %s16, 0
      %p57 = por %p55, %p56
      %p58 = scmp.ne.s32.totalorder %s50, %s52
      %p59 = scmp.eq.s32.totalorder %s21, 6
      %p60 = por %p58, %p59
      %p61 = scmp.ne.s32.totalorder %s52, %s53
      %p62 = scmp.eq.s32.totalorder %s21, 0
      %p63 = por %p61, %p62
      %p64 = scmp.ne.s32.totalorder %s52, %s53
      %p65 = scmp.eq.s32.totalorder %s22, 6
      %p66 = por %p64, %p65
      %p68 = scmp.ne.s32.totalorder %s53, %s67
      %p69 = scmp.eq.s32.totalorder %s22, 0
      %p70 = por %p68, %p69
      %s72 = sadd.s32 %s71, 1
      %p75 = scmp.eq.s32.totalorder %s16, 6
      %p76 = scmp.ne.s32.totalorder %s71, %s73
      %p77 = scmp.eq.s32.totalorder %s16, 0
      %p78 = por %p76, %p77
      %p79 = scmp.ne.s32.totalorder %s71, %s73
      %p80 = scmp.eq.s32.totalorder %s21, 6
      %p81 = por %p79, %p80
      %p82 = scmp.ne.s32.totalorder %s73, %s74
      %p83 = scmp.eq.s32.totalorder %s21, 0
      %p84 = por %p82, %p83
      %p85 = scmp.ne.s32.totalorder %s73, %s74
      %p86 = scmp.eq.s32.totalorder %s22, 6
      %p87 = por %p85, %p86
      %p89 = scmp.ne.s32.totalorder %s74, %s88
      %p90 = scmp.eq.s32.totalorder %s22, 0
      %p91 = por %p89, %p90
      %s93 = sadd.s32 %s92, 1
      %p96 = scmp.eq.s32.totalorder %s16, 6
      %p97 = scmp.ne.s32.totalorder %s92, %s94
      %p98 = scmp.eq.s32.totalorder %s16, 0
      %p99 = por %p97, %p98
      %p100 = scmp.ne.s32.totalorder %s92, %s94
      %p101 = scmp.eq.s32.totalorder %s21, 6
      %p102 = por %p100, %p101
      %p103 = scmp.ne.s32.totalorder %s94, %s95
      %p104 = scmp.eq.s32.totalorder %s21, 0
      %p105 = por %p103, %p104
      %p106 = scmp.ne.s32.totalorder %s94, %s95
      %p107 = scmp.eq.s32.totalorder %s22, 6
      %p108 = por %p106, %p107
      %p110 = scmp.ne.s32.totalorder %s95, %s109
      %p111 = scmp.eq.s32.totalorder %s22, 0
      %p112 = por %p110, %p111
      %s114 = sadd.s32 %s113, 1
      %p117 = scmp.eq.s32.totalorder %s16, 6
      %p118 = scmp.ne.s32.totalorder %s113, %s115
      %p119 = scmp.eq.s32.totalorder %s16, 0
      %p120 = por %p118, %p119
      %p121 = scmp.ne.s32.totalorder %s113, %s115
      %p122 = scmp.eq.s32.totalorder %s21, 6
      %p123 = por %p121, %p122
      %p124 = scmp.ne.s32.totalorder %s115, %s116
      %p125 = scmp.eq.s32.totalorder %s21, 0
      %p126 = por %p124, %p125
      %p127 = scmp.ne.s32.totalorder %s115, %s116
      %p128 = scmp.eq.s32.totalorder %s22, 6
      %p129 = por %p127, %p128
      %p131 = scmp.ne.s32.totalorder %s116, %s130
      %p132 = scmp.eq.s32.totalorder %s22, 0
      %p133 = por %p131, %p132
      %s135 = sadd.s32 %s134, 1
      %p138 = scmp.eq.s32.totalorder %s16, 6
      %p139 = scmp.ne.s32.totalorder %s134, %s136
      %p140 = scmp.eq.s32.totalorder %s16, 0
      %p141 = por %p139, %p140
      %p142 = scmp.ne.s32.totalorder %s134, %s136
      %p143 = scmp.eq.s32.totalorder %s21, 6
      %p144 = por %p142, %p143
      %p145 = scmp.ne.s32.totalorder %s136, %s137
      %p146 = scmp.eq.s32.totalorder %s21, 0
      %p147 = por %p145, %p146
      %p148 = scmp.ne.s32.totalorder %s136, %s137
      %p149 = scmp.eq.s32.totalorder %s22, 6
      %p150 = por %p148, %p149
      %p152 = scmp.ne.s32.totalorder %s137, %s151
      %p153 = scmp.eq.s32.totalorder %s22, 0
      %p154 = por %p152, %p153
      %s156 = sadd.s32 %s155, 1
      %p159 = scmp.eq.s32.totalorder %s16, 6
      %p160 = scmp.ne.s32.totalorder %s155, %s157
      %p161 = scmp.eq.s32.totalorder %s16, 0
      %p162 = por %p160, %p161
      %p163 = scmp.ne.s32.totalorder %s155, %s157
      %p164 = scmp.eq.s32.totalorder %s21, 6
      %p165 = por %p163, %p164
      %p166 = scmp.ne.s32.totalorder %s157, %s158
      %p167 = scmp.eq.s32.totalorder %s21, 0
      %p168 = por %p166, %p167
      %p169 = scmp.ne.s32.totalorder %s157, %s158
      %p170 = scmp.eq.s32.totalorder %s22, 6
      %p171 = por %p169, %p170
      %p173 = scmp.ne.s32.totalorder %s158, %s172
      %p174 = scmp.eq.s32.totalorder %s22, 0
      %p175 = por %p173, %p174
      %s176 = ssub.s32 %s16, %s23
      %p177 = scmp.eq.s32.totalorder %s176, 0
      %s179 = sadd.s32 %s178, 1
      %s180 = scalar_select %p177, %s178, %s179
      %p183 = pneg %p177
      %p184 = scmp.eq.s32.totalorder %s16, 6
      %p185 = por %p183, %p184
      %p186 = scmp.ne.s32.totalorder %s178, %s181
      %p187 = scmp.eq.s32.totalorder %s16, 0
      %p188 = por %p186, %p187
      %p189 = scmp.ne.s32.totalorder %s178, %s181
      %p190 = scmp.eq.s32.totalorder %s21, 6
      %p191 = por %p189, %p190
      %p192 = scmp.ne.s32.totalorder %s181, %s182
      %p193 = scmp.eq.s32.totalorder %s21, 0
      %p194 = por %p192, %p193
      %p195 = scmp.ne.s32.totalorder %s181, %s182
      %p196 = scmp.eq.s32.totalorder %s22, 6
      %p197 = por %p195, %p196
      %p199 = scmp.ne.s32.totalorder %s182, %s198
      %p200 = scmp.eq.s32.totalorder %s22, 0
      %p201 = por %p199, %p200
      %p202 = scmp.le.s32.totalorder 1, %s16
      %p203 = scmp.lt.s32.totalorder %s16, 8
      %p204 = pnand %p202, %p203
      %p205 = pneg %p204
      // Predicated region
      $region9: #{_discriminator_forward.1} parent=5 // pred_check
        _
      $region10: #{_discriminator_forward.1} parent=5 // pred_check_branch
        %207 = sbr.rel (%p204) target = $region12
      $region11: #{_discriminator_forward.1} parent=5 // pred_region
        %s208 = ssub.s32 %s16, 1
        // Predicated region
        $region13: #{_discriminator_forward.1} parent=11 // pred_check
          %p209 = pneg %p63
        $region14: #{_discriminator_forward.1} parent=11 // pred_check_branch
          %211 = sbr.rel (%p209) target = $region16
        $region15: #{_discriminator_forward.1} parent=11 // pred_region
          _
        $region16: #{_discriminator_forward.1} parent=11 // pred_fallthru
          _
        // Predicated region
        $region17: #{_discriminator_forward.1} parent=11 // pred_check
          %p212 = pneg %p84
        $region18: #{_discriminator_forward.1} parent=11 // pred_check_branch
          %214 = sbr.rel (%p212) target = $region20
        $region19: #{_discriminator_forward.1} parent=11 // pred_region
          _
        $region20: #{_discriminator_forward.1} parent=11 // pred_fallthru
          _
        // Predicated region
        $region21: #{_discriminator_forward.1} parent=11 // pred_check
          %p215 = pneg %p105
        $region22: #{_discriminator_forward.1} parent=11 // pred_check_branch
          %217 = sbr.rel (%p215) target = $region24
        $region23: #{_discriminator_forward.1} parent=11 // pred_region
          _
        $region24: #{_discriminator_forward.1} parent=11 // pred_fallthru
          _
        // Predicated region
        $region25: #{_discriminator_forward.1} parent=11 // pred_check
          %p218 = pneg %p126
        $region26: #{_discriminator_forward.1} parent=11 // pred_check_branch
          %220 = sbr.rel (%p218) target = $region28
        $region27: #{_discriminator_forward.1} parent=11 // pred_region
          _
        $region28: #{_discriminator_forward.1} parent=11 // pred_fallthru
          _
        // Predicated region
        $region29: #{_discriminator_forward.1} parent=11 // pred_check
          %p221 = pneg %p147
        $region30: #{_discriminator_forward.1} parent=11 // pred_check_branch
          %223 = sbr.rel (%p221) target = $region32
        $region31: #{_discriminator_forward.1} parent=11 // pred_region
          _
        $region32: #{_discriminator_forward.1} parent=11 // pred_fallthru
          _
        // Predicated region
        $region33: #{_discriminator_forward.1} parent=11 // pred_check
          %p224 = pneg %p168
        $region34: #{_discriminator_forward.1} parent=11 // pred_check_branch
          %226 = sbr.rel (%p224) target = $region36
        $region35: #{_discriminator_forward.1} parent=11 // pred_region
          _
        $region36: #{_discriminator_forward.1} parent=11 // pred_fallthru
          _
      $region12: #{_discriminator_forward.1} parent=5 // pred_fallthru
        _
      %p227 = scmp.lt.s32.totalorder %s16, 7
      // Predicated region
      $region37: #{_discriminator_forward.1} parent=5 // pred_check
        %p228 = pneg %p227
      $region38: #{_discriminator_forward.1} parent=5 // pred_check_branch
        %230 = sbr.rel (%p228) target = $region40
      $region39: #{_discriminator_forward.1} parent=5 // pred_region
        // Predicated region
        $region41: #{_discriminator_forward.1} parent=39 // pred_check
          %p231 = pneg %p36
        $region42: #{_discriminator_forward.1} parent=39 // pred_check_branch
          %233 = sbr.rel (%p231) target = $region44
        $region43: #{_discriminator_forward.1} parent=39 // pred_region
          %s234 = sand.u32 %s26, 1
          %s235 = scalar_lea.sflag [#allocation3], %s234
          %s236 = sand.u32 %s26, 1
          %s237 = smul.addr %s236, 16
          %s238 = scalar_lea.vmem [#allocation2], %s237
          %s239 = smul.u32 2, %s16
          %s240 = ssub.s32 13, %s239
          %p241 = scmp.lt.s32.totalorder %s240, 2
          %s242 = scalar_select %p241, %s240, 2
          %s243 = smul.u32 8, %s242
          %s244 = ssub.s32 16, %s243
          %s245 = sshll.u32 %s244, 4
          %246 = vsyncadd %s235, %s245
          %p247 = scmp.ne.s32.totalorder 0, %s243
          %s248 = smul.addr %s239, 8
          %s249 = scalar_lea.hbm %s0, %s248
          %s250 = smul.u32 8, %s242
          %s251 = sshll.u32 %s249, 4
          %s252 = int_to_ptr.hbm [resolvable:$true] %s251
          %s253 = sshll.u32 %s238, 4
          %s254 = int_to_ptr.vmem [resolvable:$true] %s253
          %s255 = sshll.u32 %s250, 4
          %259 = dma.hbm_to_vmem [thread:$0]  (%p247), %s252, %s255, %s254, %s235, 128, 128, 8
        $region44: #{_discriminator_forward.1} parent=39 // pred_fallthru
          _
      $region40: #{_discriminator_forward.1} parent=5 // pred_fallthru
        _
      %p260 = scmp.le.s32.totalorder 1, %s16
      %p261 = scmp.lt.s32.totalorder %s16, 8
      %p262 = pnand %p260, %p261
      %p263 = pneg %p262
      // Predicated region
      $region45: #{_discriminator_forward.1} parent=5 // pred_check
        _
      $region46: #{_discriminator_forward.1} parent=5 // pred_check_branch
        %265 = sbr.rel (%p262) target = $region48
      $region47: #{_discriminator_forward.1} parent=5 // pred_region
        %s266 = ssub.s32 %s16, 1
        %s267 = sand.u32 %s29, 1
        %s268 = scalar_lea.sflag [#allocation3], %s267
        %s269 = sand.u32 %s29, 1
        %s270 = smul.addr %s269, 16
        %s271 = scalar_lea.vmem [#allocation2], %s270
        // Predicated region
        $region49: #{_discriminator_forward.1} parent=47 // pred_check
          %p272 = pneg %p42
        $region50: #{_discriminator_forward.1} parent=47 // pred_check_branch
          %274 = sbr.rel (%p272) target = $region52
        $region51: #{_discriminator_forward.1} parent=47 // pred_region
          %276 = dma.done %s268, 256
        $region52: #{_discriminator_forward.1} parent=47 // pred_fallthru
          _
        %s277 = sand.u32 %s29, 1
        %s278 = scalar_lea.sflag [#allocation3], %s277
        %s279 = sand.u32 %s29, 1
        %s280 = smul.addr %s279, 16
        %s281 = scalar_lea.vmem [#allocation2], %s280
        %p282 = pneg %p42
        %p283 = pneg %p39
        %p284 = pneg %p63
        %p285 = pneg %p60
        %p286 = pneg %p84
        %p287 = pneg %p81
        %p288 = pneg %p105
        %p289 = pneg %p102
        %p290 = pneg %p126
        %p291 = pneg %p123
        %p292 = pneg %p147
        %p293 = pneg %p144
        %p294 = pneg %p168
        %p295 = pneg %p165
        %p296 = pneg %p194
        %p297 = pneg %p191
        %s298 = sand.u32 %s181, 1
        %s299 = sand.u32 %s181, 1
        %s300 = smul.addr %s299, 8
        %s301 = scalar_lea.vmem [#allocation4], %s300
        %s302 = smul.u32 2, %s21
        %s303 = ssub.s32 13, %s302
        %p304 = scmp.lt.s32.totalorder %s303, 2
        %s305 = scalar_select %p304, %s303, 2
        %s306 = smul.u32 8, %s305
        %s307 = smul.u32 2, %s21
        %s308 = ssub.s32 13, %s307
        %p309 = scmp.lt.s32.totalorder %s308, 2
        %s310 = scalar_select %p309, %s308, 2
        %s311 = smul.u32 4, %s310
        %v313 = vld [vmem:[%s271] sm:$0xff]
        %v314 = vld [vmem:[%s271 + $0x8] sm:$0xff]
        %v315 = vpack.c.bf16 %v314, %v313
        %v316 = vld [vmem:[%s1] sm:$0xf]
        %v317 = vld [vmem:[%s1 + $0x4] sm:$0xf]
        %v318 = vld [vmem:[%s1 + $0x8] sm:$0xf]
        %v319 = vld [vmem:[%s1 + $0xc] sm:$0xf]
        %v320 = vld [vmem:[%s1 + $0x10] sm:$0xf]
        %v321 = vld [vmem:[%s1 + $0x14] sm:$0xf]
        %v322 = vld [vmem:[%s1 + $0x18] sm:$0xf]
        %v323 = vld [vmem:[%s1 + $0x1c] sm:$0xf]
        %v324 = vld [vmem:[%s1 + $0x20] sm:$0xf]
        %v325 = vld [vmem:[%s1 + $0x24] sm:$0xf]
        %v326 = vld [vmem:[%s1 + $0x28] sm:$0xf]
        %v327 = vld [vmem:[%s1 + $0x2c] sm:$0xf]
        %v328 = vld [vmem:[%s1 + $0x30] sm:$0xf]
        %v329 = vld [vmem:[%s1 + $0x34] sm:$0xf]
        %v330 = vld [vmem:[%s1 + $0x38] sm:$0xf]
        %v331 = vld [vmem:[%s1 + $0x3c] sm:$0xf]
        %v332 = vld [vmem:[%s2] sm:$0x1]
        %v334 = vperm.slane %v332, 0
        %v352 = vunpack.c.l.b16 %v316
        %v353 = vunpack.c.l.b16 %v317
        %v354 = vunpack.c.l.b16 %v318
        %v355 = vunpack.c.l.b16 %v319
        %v356 = vunpack.c.l.b16 %v320
        %v357 = vunpack.c.l.b16 %v321
        %v358 = vunpack.c.l.b16 %v322
        %v359 = vunpack.c.l.b16 %v323
        %v360 = vunpack.c.l.b16 %v324
        %v361 = vunpack.c.l.b16 %v325
        %v362 = vunpack.c.l.b16 %v326
        %v363 = vunpack.c.l.b16 %v327
        %v364 = vunpack.c.l.b16 %v328
        %v365 = vunpack.c.l.b16 %v329
        %v366 = vunpack.c.l.b16 %v330
        %v367 = vunpack.c.l.b16 %v331
        %v368 = vpack.c.b16 %v353, %v352
        %v369 = vpack.c.b16 %v355, %v354
        %v370 = vpack.c.b16 %v357, %v356
        %v371 = vpack.c.b16 %v359, %v358
        %v372 = vpack.c.b16 %v361, %v360
        %v373 = vpack.c.b16 %v363, %v362
        %v374 = vpack.c.b16 %v365, %v364
        %v375 = vpack.c.b16 %v367, %v366
        %384 = vmatpush.bf16.msra.mxu0 %v375
        %385 = vmatpush.bf16.msra.mxu0 %v374
        %386 = vmatpush.bf16.msra.mxu0 %v373
        %387 = vmatpush.bf16.msra.mxu0 %v372
        %388 = vmatpush.bf16.msra.mxu0 %v371
        %389 = vmatpush.bf16.msra.mxu0 %v370
        %390 = vmatpush.bf16.msra.mxu0 %v369
        %391 = vmatpush.bf16.msra.mxu0 %v368
        %392 = vmatmul.bf16.gmra.mxu0 %v315
        %v393 = vpop.f32.mrf.mxu0
        %v394 = vadd.f32 %v334, %v393
        %v395 = vpop.f32.mrf.mxu0
        %v396 = vadd.f32 %v334, %v395
        %397 = vdwg.mxu0
        %v398 = vmax.f32 %v394, 0.0
        %v399 = vmax.f32 %v396, 0.0
        %v400 = vpack.c.bf16 %v399, %v398
        %v401 = vld [vmem:[%s3] sm:$0xf]
        %v402 = vld [vmem:[%s3 + $0x4] sm:$0xf]
        %v403 = vld [vmem:[%s3 + $0x8] sm:$0xf]
        %v404 = vld [vmem:[%s3 + $0xc] sm:$0xf]
        %v405 = vld [vmem:[%s3 + $0x10] sm:$0xf]
        %v406 = vld [vmem:[%s3 + $0x14] sm:$0xf]
        %v407 = vld [vmem:[%s3 + $0x18] sm:$0xf]
        %v408 = vld [vmem:[%s3 + $0x1c] sm:$0xf]
        %v409 = vld [vmem:[%s4] sm:$0x1]
        %v411 = vperm.slane %v409, 0
        %v421 = vunpack.c.l.b16 %v401
        %v422 = vunpack.c.l.b16 %v402
        %v423 = vunpack.c.l.b16 %v403
        %v424 = vunpack.c.l.b16 %v404
        %v425 = vunpack.c.l.b16 %v405
        %v426 = vunpack.c.l.b16 %v406
        %v427 = vunpack.c.l.b16 %v407
        %v428 = vunpack.c.l.b16 %v408
        %v429 = vpack.c.b16 %v422, %v421
        %v430 = vpack.c.b16 %v424, %v423
        %v431 = vpack.c.b16 %v426, %v425
        %v432 = vpack.c.b16 %v428, %v427
        %vm437 = vcmask 523264
        %v439 = vsel %vm437, %v400, 0
        %441 = vmatpush.bf16.msra.mxu0 0
        %442 = vmatpush.bf16.msra.mxu0 0
        %443 = vmatpush.bf16.msra.mxu0 0
        %444 = vmatpush.bf16.msra.mxu0 0
        %445 = vmatpush.bf16.msra.mxu0 %v432
        %446 = vmatpush.bf16.msra.mxu0 %v431
        %447 = vmatpush.bf16.msra.mxu0 %v430
        %448 = vmatpush.bf16.msra.mxu0 %v429
        %449 = vmatmul.bf16.gmra.mxu0 %v439
        %v450 = vpop.f32.mrf.mxu0
        %v451 = vadd.f32 %v411, %v450
        %v452 = vpop.f32.mrf.mxu0
        %v453 = vadd.f32 %v411, %v452
        %454 = vdwg.mxu0
        %v455 = vmax.f32 %v451, 0.0
        %v456 = vmax.f32 %v453, 0.0
        %v457 = vpack.c.bf16 %v456, %v455
        %v458 = vld [vmem:[%s5] sm:$0xf]
        %v459 = vld [vmem:[%s5 + $0x4] sm:$0xf]
        %v460 = vld [vmem:[%s5 + $0x8] sm:$0xf]
        %v461 = vld [vmem:[%s5 + $0xc] sm:$0xf]
        %v462 = vld [vmem:[%s5 + $0x10] sm:$0xf]
        %v463 = vld [vmem:[%s5 + $0x14] sm:$0xf]
        %v464 = vld [vmem:[%s5 + $0x18] sm:$0xf]
        %v465 = vld [vmem:[%s5 + $0x1c] sm:$0xf]
        %v466 = vld [vmem:[%s6] sm:$0x1]
        %v468 = vperm.slane %v466, 0
        %v478 = vunpack.c.l.b16 %v458
        %v479 = vunpack.c.l.b16 %v459
        %v480 = vunpack.c.l.b16 %v460
        %v481 = vunpack.c.l.b16 %v461
        %v482 = vunpack.c.l.b16 %v462
        %v483 = vunpack.c.l.b16 %v463
        %v484 = vunpack.c.l.b16 %v464
        %v485 = vunpack.c.l.b16 %v465
        %v486 = vpack.c.b16 %v479, %v478
        %v487 = vpack.c.b16 %v481, %v480
        %v488 = vpack.c.b16 %v483, %v482
        %v489 = vpack.c.b16 %v485, %v484
        %v495 = vsel %vm437, %v457, 0
        %497 = vmatpush.bf16.msra.mxu0 0
        %498 = vmatpush.bf16.msra.mxu0 0
        %499 = vmatpush.bf16.msra.mxu0 0
        %500 = vmatpush.bf16.msra.mxu0 0
        %501 = vmatpush.bf16.msra.mxu0 %v489
        %502 = vmatpush.bf16.msra.mxu0 %v488
        %503 = vmatpush.bf16.msra.mxu0 %v487
        %504 = vmatpush.bf16.msra.mxu0 %v486
        %505 = vmatmul.bf16.gmra.mxu0 %v495
        %v506 = vpop.f32.mrf.mxu0
        %v507 = vadd.f32 %v468, %v506
        %v508 = vpop.f32.mrf.mxu0
        %v509 = vadd.f32 %v468, %v508
        %510 = vdwg.mxu0
        %v511 = vxor.u32 %v507, 2147483648
        %v512 = vxor.u32 %v509, 2147483648
        %v513 = vmul.f32 %v511, 1.442695
        %v514 = vpow.pop %v513
        %v515 = vmul.f32 %v512, 1.442695
        %v516 = vpow.pop %v515
        %v517 = vadd.f32 %v514, 1.0
        %v518 = vadd.f32 %v516, 1.0
        %v519 = vrcp.pop %v517
        %v520 = vmul.f32 %v517, %v519
        %v521 = vsub.f32 1.0, %v520
        %v522 = vmul.f32 %v519, %v521
        %v523 = vadd.f32 %v519, %v522
        %vm524 = vweird.f32 %v517
        %vm525 = vweird.f32 %v519
        %vm526 = vmor %vm524, %vm525
        %v527 = vsel %vm526, %v519, %v523
        %v528 = vand.u32 2147483647, %v517
        %vm529 = vcmp.eq.f32.partialorder %v528, 8.507059e+37
        %v530 = vand.u32 %v517, 2147483648
        %v531 = vor.u32 1.1754944e-38, %v530
        %v532 = vsel %vm529, %v531, %v527
        %v533 = vmul.f32 1.0, %v532
        %v534 = vrcp.pop %v518
        %v535 = vmul.f32 %v518, %v534
        %v536 = vsub.f32 1.0, %v535
        %v537 = vmul.f32 %v534, %v536
        %v538 = vadd.f32 %v534, %v537
        %vm539 = vweird.f32 %v518
        %vm540 = vweird.f32 %v534
        %vm541 = vmor %vm539, %vm540
        %v542 = vsel %vm541, %v534, %v538
        %v543 = vand.u32 2147483647, %v518
        %vm544 = vcmp.eq.f32.partialorder %v543, 8.507059e+37
        %v545 = vand.u32 %v518, 2147483648
        %v546 = vor.u32 1.1754944e-38, %v545
        %v547 = vsel %vm544, %v546, %v542
        %v548 = vmul.f32 1.0, %v547
        %v549 = vpack.c.bf16 %v533, %v533
        %v550 = vpack.c.bf16 %v548, %v548
        %551 = vst [vmem:[%s301] sm:$0xf] %v549
        %552 = vst [vmem:[%s301 + $0x4] sm:$0xf] %v550
        %s553 = sand.u32 %s181, 1
        %s554 = sand.u32 %s181, 1
        %s555 = smul.addr %s554, 8
        %s556 = scalar_lea.vmem [#allocation4], %s555
        // Predicated region
        $region53: #{_discriminator_forward.1} parent=47 // pred_check
          %p557 = pneg %p191
        $region54: #{_discriminator_forward.1} parent=47 // pred_check_branch
          %559 = sbr.rel (%p557) target = $region56
        $region55: #{_discriminator_forward.1} parent=47 // pred_region
          %s560 = smul.u32 2, %s21
          %s561 = ssub.s32 13, %s560
          %p562 = scmp.lt.s32.totalorder %s561, 2
          %s563 = scalar_select %p562, %s561, 2
          %s564 = smul.u32 4, %s563
          %p565 = scmp.ne.s32.totalorder 0, %s564
          %s566 = smul.addr %s560, 4
          %s567 = scalar_lea.vmem %s7, %s566
          // Predicated region
          $region57: #{_discriminator_forward.1} parent=55 // pred_check
            %p568 = pneg %p565
          $region58: #{_discriminator_forward.1} parent=55 // pred_check_branch
            %570 = sbr.rel (%p568) target = $region60
          $region59: #{_discriminator_forward.1} parent=55 // pred_region
            // Predicated region
            $region61: #{_discriminator_forward.1} parent=59 // pred_check
              _
            $region62: #{_discriminator_forward.1} parent=59 // pred_check_branch
              %572 = sbr.rel target = $region64
            $region63: #{_discriminator_forward.1} parent=59 // pred_region
              // Predicated region
              $region83: #{_discriminator_forward.1} parent=63 // pred_check
                _
              $region84: #{_discriminator_forward.1} parent=63 // pred_check_branch
                %624 = sbr.rel (0) target = $region86
              $region85: #{_discriminator_forward.1} parent=63 // pred_region
                %s626 = ssub.s32 16, 1
                %s627 = sshrl.u32 %s563, 1
                // While loop
                $region87: #{_discriminator_forward.1} parent=85 // loop_pre_header
                  _
                $region88: #{_discriminator_forward.1} parent=85 // loop_header
                  %s629 = sphi 0, %s631
                  %p630 = scmp.ge.s32.totalorder %s629, %s627
                  %s634 = sphi 0, %s643
                  %s635 = sphi %s556, %s646
                  %s636 = sphi %s567, %s647
                $region89: #{_discriminator_forward.1} parent=85 // loop_header_branch
                  %633 = sbr.rel (%p630) target = $region93
                $region90: #{_discriminator_forward.1} parent=85 // loop_body
                  %v637 = vld [vmem:[%s635] sm:%s626]
                  %638 = vst [vmem:[%s636] sm:%s626] %v637
                  %v639 = vld [vmem:[%s635 + $0x4] sm:%s626]
                  %640 = vst [vmem:[%s636 + $0x4] sm:%s626] %v639
                  %s641 = sadd.s32 1, %s634
                  %p642 = scmp.ge.s32.totalorder %s641, %s627
                  %s643 = scalar_select %p642, 0, %s641
                  %s644 = smul.u32 %s643, 8
                  %s645 = smul.u32 %s643, 8
                  %s646 = scalar_lea.vmem %s556, %s644 [#allocation4]
                  %s647 = scalar_lea.vmem %s567, %s645
                $region91: #{_discriminator_forward.1} parent=85 // loop_footer
                  %s631 = sadd.s32 %s629, 1
                $region92: #{_discriminator_forward.1} parent=85 // loop_footer_branch
                  %628 = sbr.rel target = $region88
                $region93: #{_discriminator_forward.1} parent=85 // loop_exit
                  _
                %s648 = sshrl.u32 %s563, 1
                %s649 = sand.u32 %s563, 1
                %s650 = smul.u32 %s648, 2
                %s651 = smul.u32 4, %s650
                %s652 = scalar_lea.vmem %s556, %s651 [#allocation4]
                %s653 = smul.u32 4, %s650
                %s654 = scalar_lea.vmem %s567, %s653
                // While loop
                $region94: #{_discriminator_forward.1} parent=85 // loop_pre_header
                  _
                $region95: #{_discriminator_forward.1} parent=85 // loop_header
                  %s656 = sphi 0, %s658
                  %p657 = scmp.ge.s32.totalorder %s656, %s649
                  %s661 = sphi 0, %s668
                  %s662 = sphi %s652, %s671
                  %s663 = sphi %s654, %s672
                $region96: #{_discriminator_forward.1} parent=85 // loop_header_branch
                  %660 = sbr.rel (%p657) target = $region100
                $region97: #{_discriminator_forward.1} parent=85 // loop_body
                  %v664 = vld [vmem:[%s662] sm:%s626]
                  %665 = vst [vmem:[%s663] sm:%s626] %v664
                  %s666 = sadd.s32 1, %s661
                  %p667 = scmp.ge.s32.totalorder %s666, %s649
                  %s668 = scalar_select %p667, 0, %s666
                  %s669 = smul.u32 %s668, 4
                  %s670 = smul.u32 %s668, 4
                  %s671 = scalar_lea.vmem %s652, %s669 [#allocation4]
                  %s672 = scalar_lea.vmem %s654, %s670
                $region98: #{_discriminator_forward.1} parent=85 // loop_footer
                  %s658 = sadd.s32 %s656, 1
                $region99: #{_discriminator_forward.1} parent=85 // loop_footer_branch
                  %655 = sbr.rel target = $region95
                $region100: #{_discriminator_forward.1} parent=85 // loop_exit
                  _
              $region86: #{_discriminator_forward.1} parent=63 // pred_fallthru
                _
            $region64: #{_discriminator_forward.1} parent=59 // pred_fallthru
              _
            // Predicated region
            $region65: #{_discriminator_forward.1} parent=59 // pred_check
              _
            $region66: #{_discriminator_forward.1} parent=59 // pred_check_branch
              %574 = sbr.rel (0) target = $region68
            $region67: #{_discriminator_forward.1} parent=59 // pred_region
              %s576 = ssub.s32 16, 1
              %s577 = sshrl.u32 %s563, 1
              // While loop
              $region69: #{_discriminator_forward.1} parent=67 // loop_pre_header
                _
              $region70: #{_discriminator_forward.1} parent=67 // loop_header
                %s579 = sphi 0, %s581
                %p580 = scmp.ge.s32.totalorder %s579, %s577
                %s584 = sphi 0, %s593
                %s585 = sphi %s556, %s596
                %s586 = sphi %s567, %s597
              $region71: #{_discriminator_forward.1} parent=67 // loop_header_branch
                %583 = sbr.rel (%p580) target = $region75
              $region72: #{_discriminator_forward.1} parent=67 // loop_body
                %v587 = vld [vmem:[%s585] sm:%s576]
                %588 = vst [vmem:[%s586] sm:%s576] %v587
                %v589 = vld [vmem:[%s585 + $0x4] sm:%s576]
                %590 = vst [vmem:[%s586 + $0x4] sm:%s576] %v589
                %s591 = sadd.s32 1, %s584
                %p592 = scmp.ge.s32.totalorder %s591, %s577
                %s593 = scalar_select %p592, 0, %s591
                %s594 = smul.u32 %s593, 8
                %s595 = smul.u32 %s593, 8
                %s596 = scalar_lea.vmem %s556, %s594 [#allocation4]
                %s597 = scalar_lea.vmem %s567, %s595
              $region73: #{_discriminator_forward.1} parent=67 // loop_footer
                %s581 = sadd.s32 %s579, 1
              $region74: #{_discriminator_forward.1} parent=67 // loop_footer_branch
                %578 = sbr.rel target = $region70
              $region75: #{_discriminator_forward.1} parent=67 // loop_exit
                _
              %s598 = sshrl.u32 %s563, 1
              %s599 = sand.u32 %s563, 1
              %s600 = smul.u32 %s598, 2
              %s601 = smul.u32 4, %s600
              %s602 = scalar_lea.vmem %s556, %s601 [#allocation4]
              %s603 = smul.u32 4, %s600
              %s604 = scalar_lea.vmem %s567, %s603
              // While loop
              $region76: #{_discriminator_forward.1} parent=67 // loop_pre_header
                _
              $region77: #{_discriminator_forward.1} parent=67 // loop_header
                %s606 = sphi 0, %s608
                %p607 = scmp.ge.s32.totalorder %s606, %s599
                %s611 = sphi 0, %s618
                %s612 = sphi %s602, %s621
                %s613 = sphi %s604, %s622
              $region78: #{_discriminator_forward.1} parent=67 // loop_header_branch
                %610 = sbr.rel (%p607) target = $region82
              $region79: #{_discriminator_forward.1} parent=67 // loop_body
                %v614 = vld [vmem:[%s612] sm:%s576]
                %615 = vst [vmem:[%s613] sm:%s576] %v614
                %s616 = sadd.s32 1, %s611
                %p617 = scmp.ge.s32.totalorder %s616, %s599
                %s618 = scalar_select %p617, 0, %s616
                %s619 = smul.u32 %s618, 4
                %s620 = smul.u32 %s618, 4
                %s621 = scalar_lea.vmem %s602, %s619 [#allocation4]
                %s622 = scalar_lea.vmem %s604, %s620
              $region80: #{_discriminator_forward.1} parent=67 // loop_footer
                %s608 = sadd.s32 %s606, 1
              $region81: #{_discriminator_forward.1} parent=67 // loop_footer_branch
                %605 = sbr.rel target = $region77
              $region82: #{_discriminator_forward.1} parent=67 // loop_exit
                _
            $region68: #{_discriminator_forward.1} parent=59 // pred_fallthru
              _
          $region60: #{_discriminator_forward.1} parent=55 // pred_fallthru
            _
          %673 = vnop
        $region56: #{_discriminator_forward.1} parent=47 // pred_fallthru
          _
      $region48: #{_discriminator_forward.1} parent=5 // pred_fallthru
        _
      %p674 = scmp.le.s32.totalorder 2, %s16
      // Predicated region
      $region101: #{_discriminator_forward.1} parent=5 // pred_check
        %p675 = pneg %p674
      $region102: #{_discriminator_forward.1} parent=5 // pred_check_branch
        %677 = sbr.rel (%p675) target = $region104
      $region103: #{_discriminator_forward.1} parent=5 // pred_region
        %s678 = ssub.s32 %s16, 2
        // Predicated region
        $region105: #{_discriminator_forward.1} parent=103 // pred_check
          %p679 = pneg %p197
        $region106: #{_discriminator_forward.1} parent=103 // pred_check_branch
          %681 = sbr.rel (%p679) target = $region108
        $region107: #{_discriminator_forward.1} parent=103 // pred_region
          %s682 = sand.u32 %s182, 1
          %s683 = sand.u32 %s182, 1
          %s684 = smul.addr %s683, 8
          %s685 = scalar_lea.vmem [#allocation4], %s684
        $region108: #{_discriminator_forward.1} parent=103 // pred_fallthru
          _
      $region104: #{_discriminator_forward.1} parent=5 // pred_fallthru
        _
    $region6: #{_discriminator_forward.1} parent=1 // loop_footer
      %s20 = sadd.s32 1, %s16
    $region7: #{_discriminator_forward.1} parent=1 // loop_footer_branch
      %15 = sbr.rel target = $region3
    $region8: #{_discriminator_forward.1} parent=1 // loop_exit
      _
    %686 = vsyncpa [#allocation3], 1
    %s687 = scalar_lea.sflag [#allocation3], 1
    %688 = vsyncpa %s687, 1

</llo_original>
